<compile_context>
chip_gen: v6e
topology: v6e:2x2x1
jax: 0.10.0
libtpu: 0.0.40
codegen_flags: <defaults>
</compile_context>

<pallas_src>
import jax
import jax.numpy as jnp
from jax.experimental import pallas as pl
from jax.experimental.pallas import tpu as pltpu

# ---------------- model config (small, consistent with the module) ----------
DEPTH = 5
NODE_FEATURES = 1
HIDDEN = 32
OUT_FEATURES = 1
N_NODES = 32
N_GRAPHS = 2

# ---------------- packed-parameter layout (8-row aligned, [8, HIDDEN]) -------
ROW_C_KEEP = 0           # [1, H]  w_emb @ W1                      (ground nodes)
ROW_C_EVO = 1            # [1, H]  (w_emb @ W^DEPTH) @ W1          (evolved nodes)
ROW_D_KEEP = 2           # [1, H]  b_emb @ W1
ROW_D_EVO = 3            # [1, H]  (b_emb @ W^DEPTH + b_geo) @ W1
ROW_B1 = 4               # [1, H]  linear_1 bias
ROW_W2 = 5               # [1, H]  linear_2 weight (stored as a row)
ROW_B2 = 6               # [1, H]  linear_2 bias broadcast (scalar read from lane 0)
PACK_ROWS = 8


def _kernel(node_ref, seg_ref, param_ref, o_ref):
    nd = node_ref[...]                                 # [B*N, 2]  (x | ground mask)
    x = nd[:, 0:1]                                     # [B*N, 1]
    ground = nd[:, 1:2]                                # [B*N, 1]
    seg = seg_ref[...]                                 # [B*G, B*N] block-diag one-hot

    c_keep = param_ref[ROW_C_KEEP:ROW_C_KEEP + 1, :]   # [1, H]
    c_evo = param_ref[ROW_C_EVO:ROW_C_EVO + 1, :]      # [1, H]
    d_keep = param_ref[ROW_D_KEEP:ROW_D_KEEP + 1, :]   # [1, H]
    d_evo = param_ref[ROW_D_EVO:ROW_D_EVO + 1, :]      # [1, H]
    b1 = param_ref[ROW_B1:ROW_B1 + 1, :]               # [1, H]
    w2r = param_ref[ROW_W2:ROW_W2 + 1, :]              # [1, H]
    b2 = param_ref[ROW_B2:ROW_B2 + 1, 0:1]             # [1, 1]

    # ground-node select is between the two pre-folded coefficient rows (pure VPU):
    is_ground = ground > 0.0
    c = jnp.where(is_ground, c_keep, c_evo)            # [B*N, H]
    d = jnp.where(is_ground, d_keep, d_evo)            # [B*N, H]
    hw1 = x * c + d                                    # [B*N, H] == (h_final @ W1) per node

    # global_add_pool (fused with linear_1): one MXU matmul, full K = B*N = 128.
    pooled_w1 = jnp.dot(seg, hw1, preferred_element_type=jnp.float32)  # [B*G, H]

    # ReLU, then linear_2 (N=1): VPU multiply + XLU lane reduction + bias.
    z = jnp.maximum(pooled_w1 + b1, 0.0)               # [B*G, H]
    o_ref[...] = jnp.sum(z * w2r, axis=-1, keepdims=True) + b2   # [B*G, 1] one store


def pack_params(params):
    """Collapse the depth recurrence + embed rank-1 + linear_1 into a [8, H] pack."""
    w_emb, b_emb, w_test, b_test, w1, b1, w2, b2 = params

    # W_eff = W^DEPTH ; b_geo = b @ (I + W + ... + W^(DEPTH-1))
    w_eff = w_test
    geo = jnp.eye(HIDDEN, dtype=jnp.float32)
    pw = jnp.eye(HIDDEN, dtype=jnp.float32)
    for _ in range(DEPTH - 1):
        w_eff = w_eff @ w_test
        pw = pw @ w_test
        geo = geo + pw
    b_geo = b_test @ geo

    # rank-1 embed fold (NODE_FEATURES == 1), then fold linear_1 on top.
    w_emb_eff = w_emb @ w_eff                          # [1, H]
    b_emb_eff = b_emb @ w_eff + b_geo                  # [1, H]
    c_keep = w_emb @ w1
    c_evo = w_emb_eff @ w1
    d_keep = b_emb @ w1
    d_evo = b_emb_eff @ w1

    pack = jnp.zeros((PACK_ROWS, HIDDEN), jnp.float32)
    pack = pack.at[ROW_C_KEEP:ROW_C_KEEP + 1, :].set(c_keep)
    pack = pack.at[ROW_C_EVO:ROW_C_EVO + 1, :].set(c_evo)
    pack = pack.at[ROW_D_KEEP:ROW_D_KEEP + 1, :].set(d_keep)
    pack = pack.at[ROW_D_EVO:ROW_D_EVO + 1, :].set(d_evo)
    pack = pack.at[ROW_B1:ROW_B1 + 1, :].set(b1)
    pack = pack.at[ROW_W2:ROW_W2 + 1, :].set(w2.T)
    pack = pack.at[ROW_B2:ROW_B2 + 1, :].set(jnp.broadcast_to(b2, (1, HIDDEN)))
    return pack


def fractal_gnn_no_rel_forward(x, ground_node, batch_ids, params):
    """x: [B, N, NODE_FEATURES] f32, ground_node: [B, N] bool, batch_ids: [B, N] int32.

    Returns [B, N_GRAPHS, OUT_FEATURES] — one forward pass of the (simplified)
    Fractal_GNN_no_rel per batch element, all B problems sharing the weights.
    Nodes whose batch_ids lie outside [0, N_GRAPHS) are silently dropped by the
    one-hot pooling (same as segment_sum).
    """
    bsz, n, f = x.shape
    assert f == NODE_FEATURES == 1 and n == N_NODES
    bn = bsz * n
    bg = bsz * N_GRAPHS

    param_pack = pack_params(params)

    # glue built in the wrapper (cheap, done once per call): fold B into the node dim.
    node_pack = jnp.concatenate(
        [x.reshape(bn, 1), ground_node.astype(jnp.float32).reshape(bn, 1)],
        axis=-1)                                                    # [B*N, 2]
    gid = (batch_ids.astype(jnp.int32) +
           N_GRAPHS * jnp.arange(bsz, dtype=jnp.int32)[:, None]).reshape(bn)
    seg = (gid[None, :] == jnp.arange(bg, dtype=jnp.int32)[:, None]
           ).astype(jnp.float32)                                    # [B*G, B*N] block-diag

    out = pl.pallas_call(
        _kernel,
        out_shape=jax.ShapeDtypeStruct((bg, OUT_FEATURES), jnp.float32),
        grid=(1,),
        in_specs=[
            pl.BlockSpec((bn, NODE_FEATURES + 1), lambda i: (0, 0)),   # node data
            pl.BlockSpec((bg, bn), lambda i: (0, 0)),                  # block-diag one-hot
            pl.BlockSpec((PACK_ROWS, HIDDEN), lambda i: (0, 0)),       # packed params
        ],
        out_specs=pl.BlockSpec((bg, OUT_FEATURES), lambda i: (0, 0)),
        compiler_params=pltpu.CompilerParams(
            dimension_semantics=("arbitrary",)),
    )(node_pack, seg, param_pack)
    return out.reshape(bsz, N_GRAPHS, OUT_FEATURES)


def _reference(x, ground_node, batch_ids, params):
    """Iterative (non-collapsed) reference for a single problem."""
    w_emb, b_emb, w_test, b_test, w1, b1, w2, b2 = params
    h = x @ w_emb + b_emb
    g = ground_node[:, None]
    for _ in range(DEPTH):
        h_new = h @ w_test + b_test
        h = jnp.where(g, h, h_new)
    pooled = jax.ops.segment_sum(h, batch_ids, num_segments=N_GRAPHS)
    z = jnp.maximum(pooled @ w1 + b1, 0.0)
    return z @ w2 + b2


def init_params(key):
    ks = jax.random.split(key, 8)
    scale = 0.1
    w_emb = scale * jax.random.normal(ks[0], (NODE_FEATURES, HIDDEN), jnp.float32)
    b_emb = scale * jax.random.normal(ks[1], (1, HIDDEN), jnp.float32)
    w_test = scale * jax.random.normal(ks[2], (HIDDEN, HIDDEN), jnp.float32)
    b_test = scale * jax.random.normal(ks[3], (1, HIDDEN), jnp.float32)
    w1 = scale * jax.random.normal(ks[4], (HIDDEN, HIDDEN), jnp.float32)
    b1 = scale * jax.random.normal(ks[5], (1, HIDDEN), jnp.float32)
    w2 = scale * jax.random.normal(ks[6], (HIDDEN, OUT_FEATURES), jnp.float32)
    b2 = scale * jax.random.normal(ks[7], (1, OUT_FEATURES), jnp.float32)
    return (w_emb, b_emb, w_test, b_test, w1, b1, w2, b2)


if __name__ == "__main__":
    key = jax.random.PRNGKey(0)
    k_x, k_g, k_p = jax.random.split(key, 3)

    B = 4  # independent problems, folded into the node/M dimension (B*N = 128)
    x = jax.random.normal(k_x, (B, N_NODES, NODE_FEATURES), jnp.float32)
    ground_node = jax.random.bernoulli(k_g, 0.5, (B, N_NODES))
    # nodes 0..15 -> graph 0, nodes 16..31 -> graph 1 (same layout per problem)
    batch_ids = jnp.broadcast_to(
        jnp.concatenate([jnp.zeros(N_NODES // 2, jnp.int32),
                         jnp.ones(N_NODES // 2, jnp.int32)]),
        (B, N_NODES))
    params = init_params(k_p)

    out = fractal_gnn_no_rel_forward(x, ground_node, batch_ids, params)
    out = jax.block_until_ready(out)

    ref = jax.vmap(lambda xx, gg, bb: _reference(xx, gg, bb, params))(
        x, ground_node, batch_ids)
    assert out.shape == (B, N_GRAPHS, OUT_FEATURES)
    assert jnp.allclose(out, ref, atol=1e-4, rtol=1e-4), (out, ref)
    print("KERNEL_OK")
</pallas_src>

<mosaic_0001>
module attributes {stable_mosaic.version = 11 : i64} {
  func.func @_kernel(%arg0: i32, %arg1: memref<128x2xf32, #tpu.memory_space<vmem>>, %arg2: memref<8x128xf32, #tpu.memory_space<vmem>>, %arg3: memref<8x32xf32, #tpu.memory_space<vmem>>, %arg4: memref<8x1xf32, #tpu.memory_space<vmem>>) attributes {dimension_semantics = [#tpu.dimension_semantics<arbitrary>], iteration_bounds = array<i64: 1>, scalar_prefetch = 0 : i64, scratch_operands = 0 : i64, tpu.core_type = #tpu.core_type<tc>, window_params = [{pipeline_mode = #tpu.pipeline_mode<synchronous>, transform_indices = @transform_0, window_bounds = array<i64: 128, 2>}, {pipeline_mode = #tpu.pipeline_mode<synchronous>, transform_indices = @transform_1, window_bounds = array<i64: 8, 128>}, {pipeline_mode = #tpu.pipeline_mode<synchronous>, transform_indices = @transform_2, window_bounds = array<i64: 8, 32>}, {pipeline_mode = #tpu.pipeline_mode<synchronous>, transform_indices = @transform_3, window_bounds = array<i64: 8, 1>}]} {
    %c0 = arith.constant 0 : index
    %c0_0 = arith.constant 0 : index
    %0 = vector.load %arg1[%c0, %c0_0] : memref<128x2xf32, #tpu.memory_space<vmem>>, vector<128x2xf32>
    %1 = vector.extract_strided_slice %0 {offsets = [0, 0], sizes = [128, 1], strides = [1, 1]} : vector<128x2xf32> to vector<128x1xf32>
    %2 = vector.extract_strided_slice %0 {offsets = [0, 1], sizes = [128, 1], strides = [1, 1]} : vector<128x2xf32> to vector<128x1xf32>
    %c0_1 = arith.constant 0 : index
    %c0_2 = arith.constant 0 : index
    %3 = vector.load %arg2[%c0_1, %c0_2] : memref<8x128xf32, #tpu.memory_space<vmem>>, vector<8x128xf32>
    %c0_3 = arith.constant 0 : index
    %c0_4 = arith.constant 0 : index
    %4 = vector.load %arg3[%c0_3, %c0_4] : memref<8x32xf32, #tpu.memory_space<vmem>>, vector<1x32xf32>
    %c1 = arith.constant 1 : index
    %c0_5 = arith.constant 0 : index
    %5 = vector.load %arg3[%c1, %c0_5] : memref<8x32xf32, #tpu.memory_space<vmem>>, vector<1x32xf32>
    %c2 = arith.constant 2 : index
    %c0_6 = arith.constant 0 : index
    %6 = vector.load %arg3[%c2, %c0_6] : memref<8x32xf32, #tpu.memory_space<vmem>>, vector<1x32xf32>
    %c3 = arith.constant 3 : index
    %c0_7 = arith.constant 0 : index
    %7 = vector.load %arg3[%c3, %c0_7] : memref<8x32xf32, #tpu.memory_space<vmem>>, vector<1x32xf32>
    %c4 = arith.constant 4 : index
    %c0_8 = arith.constant 0 : index
    %8 = vector.load %arg3[%c4, %c0_8] : memref<8x32xf32, #tpu.memory_space<vmem>>, vector<1x32xf32>
    %c5 = arith.constant 5 : index
    %c0_9 = arith.constant 0 : index
    %9 = vector.load %arg3[%c5, %c0_9] : memref<8x32xf32, #tpu.memory_space<vmem>>, vector<1x32xf32>
    %c6 = arith.constant 6 : index
    %c0_10 = arith.constant 0 : index
    %10 = vector.load %arg3[%c6, %c0_10] : memref<8x32xf32, #tpu.memory_space<vmem>>, vector<1x1xf32>
    %cst = arith.constant 0.000000e+00 : f32
    %11 = vector.broadcast %cst : f32 to vector<128x1xf32>
    %12 = arith.cmpf ogt, %2, %11 : vector<128x1xf32>
    %13 = vector.shape_cast %12 : vector<128x1xi1> to vector<128x1xi1>
    %14 = vector.broadcast %13 : vector<128x1xi1> to vector<128x32xi1>
    %15 = vector.shape_cast %4 : vector<1x32xf32> to vector<1x32xf32>
    %16 = vector.broadcast %15 : vector<1x32xf32> to vector<128x32xf32>
    %17 = vector.shape_cast %5 : vector<1x32xf32> to vector<1x32xf32>
    %18 = vector.broadcast %17 : vector<1x32xf32> to vector<128x32xf32>
    %19 = arith.select %14, %16, %18 : vector<128x32xi1>, vector<128x32xf32>
    %20 = vector.shape_cast %12 : vector<128x1xi1> to vector<128x1xi1>
    %21 = vector.broadcast %20 : vector<128x1xi1> to vector<128x32xi1>
    %22 = vector.shape_cast %6 : vector<1x32xf32> to vector<1x32xf32>
    %23 = vector.broadcast %22 : vector<1x32xf32> to vector<128x32xf32>
    %24 = vector.shape_cast %7 : vector<1x32xf32> to vector<1x32xf32>
    %25 = vector.broadcast %24 : vector<1x32xf32> to vector<128x32xf32>
    %26 = arith.select %21, %23, %25 : vector<128x32xi1>, vector<128x32xf32>
    %27 = vector.broadcast %1 : vector<128x1xf32> to vector<128x32xf32>
    %28 = arith.mulf %27, %19 : vector<128x32xf32>
    %29 = arith.addf %28, %26 : vector<128x32xf32>
    %cst_11 = arith.constant dense<0.000000e+00> : vector<8x32xf32>
    %30 = tpu.matmul %3, %29, %cst_11 {dimension_numbers = #tpu.dot_dimension_numbers<[1], [0], [0], [1], [0, 0, 1, 1], [], []>} : vector<8x128xf32>, vector<128x32xf32>, vector<8x32xf32> -> vector<8x32xf32>
    %31 = vector.broadcast %8 : vector<1x32xf32> to vector<8x32xf32>
    %32 = arith.addf %30, %31 : vector<8x32xf32>
    %cst_12 = arith.constant 0.000000e+00 : f32
    %33 = vector.broadcast %cst_12 : f32 to vector<8x32xf32>
    %34 = arith.maximumf %32, %33 : vector<8x32xf32>
    %35 = vector.broadcast %9 : vector<1x32xf32> to vector<8x32xf32>
    %36 = arith.mulf %34, %35 : vector<8x32xf32>
    %cst_13 = arith.constant dense<0.000000e+00> : vector<8xf32>
    %37 = vector.multi_reduction <add>, %36, %cst_13 [1] : vector<8x32xf32> to vector<8xf32>
    %38 = vector.shape_cast %37 : vector<8xf32> to vector<8x1xf32>
    %39 = vector.broadcast %10 : vector<1x1xf32> to vector<8x1xf32>
    %40 = arith.addf %38, %39 : vector<8x1xf32>
    %c0_14 = arith.constant 0 : index
    %c0_15 = arith.constant 0 : index
    %41 = vector.load %arg4[%c0_14, %c0_15] : memref<8x1xf32, #tpu.memory_space<vmem>>, vector<8x1xf32>
    tpu.vector_store %arg4[%c0_14, %c0_15], %40 {strides = array<i32>} : memref<8x1xf32, #tpu.memory_space<vmem>>, vector<8x1xf32>,
    return
  }
  func.func @transform_0(%arg0: i32) -> (i32, i32) {
    %c0_i32 = arith.constant 0 : i32
    %c0_i32_0 = arith.constant 0 : i32
    %c0_i32_1 = arith.constant 0 : i32
    return %c0_i32, %c0_i32_0 : i32, i32
  }
  func.func @transform_1(%arg0: i32) -> (i32, i32) {
    %c0_i32 = arith.constant 0 : i32
    %c0_i32_0 = arith.constant 0 : i32
    %c0_i32_1 = arith.constant 0 : i32
    return %c0_i32, %c0_i32_0 : i32, i32
  }
  func.func @transform_2(%arg0: i32) -> (i32, i32) {
    %c0_i32 = arith.constant 0 : i32
    %c0_i32_0 = arith.constant 0 : i32
    %c0_i32_1 = arith.constant 0 : i32
    return %c0_i32, %c0_i32_0 : i32, i32
  }
  func.func @transform_3(%arg0: i32) -> (i32, i32) {
    %c0_i32 = arith.constant 0 : i32
    %c0_i32_0 = arith.constant 0 : i32
    %c0_i32_1 = arith.constant 0 : i32
    return %c0_i32, %c0_i32_0 : i32, i32
  }
}

</mosaic_0001>

<llo_original>
// kernel: tpu_custom_call.1
$region0: #{tpu_custom_call.1}
  #allocation0 [shape = 'u32[]', space=smem, size = 0x4, offset = 0x4, fixed_abs, tag = 'smem constant byte address 0x4 - core index']
  #allocation1 [shape = 'u32[144,128]{1,0:T(1,128)}', space=vmem, size = 0x12000, scoped, tag = 'internal scratch']
  %s0 = inlined_call_operand.vmem [shape: f32[128,2], index: 0, kind: input, shape index: {}]
  %s1 = inlined_call_operand.vmem [shape: f32[8,128], index: 1, kind: input, shape index: {}]
  %s2 = inlined_call_operand.vmem [shape: f32[8,32], index: 2, kind: input, shape index: {}]
  %s3 = inlined_call_operand.vmem [shape: f32[8,1], index: 3, kind: output, shape index: {}]
  %s4 = sld [smem:[#allocation0]]
  $region22: #{tpu_custom_call.1} parent=0
    _
  %s6 = ssub.s32 1, %s4
  %s7 = scalar_select 0, %s6, %s4
  // Predicated region
  $region2: #{tpu_custom_call.1} parent=0 // pred_check
    _
  $region3: #{tpu_custom_call.1} parent=0 // pred_check_branch
    %9 = sbr.rel (0) target = $region5
  $region4: #{tpu_custom_call.1} parent=0 // pred_region
    _
  $region5: #{tpu_custom_call.1} parent=0 // pred_fallthru
    _
  // Predicated region
  $region6: #{tpu_custom_call.1} parent=0 // pred_check
    _
  $region7: #{tpu_custom_call.1} parent=0 // pred_check_branch
    %11 = sbr.rel (0) target = $region9
  $region8: #{tpu_custom_call.1} parent=0 // pred_region
    _
  $region9: #{tpu_custom_call.1} parent=0 // pred_fallthru
    _
  // Predicated region
  $region10: #{tpu_custom_call.1} parent=0 // pred_check
    _
  $region11: #{tpu_custom_call.1} parent=0 // pred_check_branch
    %13 = sbr.rel (0) target = $region13
  $region12: #{tpu_custom_call.1} parent=0 // pred_region
    _
  $region13: #{tpu_custom_call.1} parent=0 // pred_fallthru
    _
  %v14 = vld [vmem:[%s0] sm:$0xff]
  %v15 = vld [vmem:[%s0 + $0x8] sm:$0xff]
  %v16 = vld [vmem:[%s0 + $0x10] sm:$0xff]
  %v17 = vld [vmem:[%s0 + $0x18] sm:$0xff]
  %v18 = vld [vmem:[%s0 + $0x20] sm:$0xff]
  %v19 = vld [vmem:[%s0 + $0x28] sm:$0xff]
  %v20 = vld [vmem:[%s0 + $0x30] sm:$0xff]
  %v21 = vld [vmem:[%s0 + $0x38] sm:$0xff]
  %v22 = vld [vmem:[%s0 + $0x40] sm:$0xff]
  %v23 = vld [vmem:[%s0 + $0x48] sm:$0xff]
  %v24 = vld [vmem:[%s0 + $0x50] sm:$0xff]
  %v25 = vld [vmem:[%s0 + $0x58] sm:$0xff]
  %v26 = vld [vmem:[%s0 + $0x60] sm:$0xff]
  %v27 = vld [vmem:[%s0 + $0x68] sm:$0xff]
  %v28 = vld [vmem:[%s0 + $0x70] sm:$0xff]
  %v29 = vld [vmem:[%s0 + $0x78] sm:$0xff]
  %v30 = vld [vmem:[%s1] sm:$0xff]
  %v31 = vld [vmem:[%s2] sm:$0x1]
  %v32 = vld [vmem:[%s2 + $0x1] sm:$0x1]
  %v33 = vld [vmem:[%s2 + $0x2] sm:$0x1]
  %v34 = vld [vmem:[%s2 + $0x3] sm:$0x1]
  %v35 = vld [vmem:[%s2 + $0x4] sm:$0x1]
  %v36 = vld [vmem:[%s2 + $0x5] sm:$0x1]
  %v37 = vld [vmem:[%s2 + $0x6] sm:$0x1]
  %vm38 = vcmp.gt.f32.partialorder %v14, 0.0
  %vm39 = vcmp.gt.f32.partialorder %v15, 0.0
  %vm40 = vcmp.gt.f32.partialorder %v16, 0.0
  %vm41 = vcmp.gt.f32.partialorder %v17, 0.0
  %vm42 = vcmp.gt.f32.partialorder %v18, 0.0
  %vm43 = vcmp.gt.f32.partialorder %v19, 0.0
  %vm44 = vcmp.gt.f32.partialorder %v20, 0.0
  %vm45 = vcmp.gt.f32.partialorder %v21, 0.0
  %vm46 = vcmp.gt.f32.partialorder %v22, 0.0
  %vm47 = vcmp.gt.f32.partialorder %v23, 0.0
  %vm48 = vcmp.gt.f32.partialorder %v24, 0.0
  %vm49 = vcmp.gt.f32.partialorder %v25, 0.0
  %vm50 = vcmp.gt.f32.partialorder %v26, 0.0
  %vm51 = vcmp.gt.f32.partialorder %v27, 0.0
  %vm52 = vcmp.gt.f32.partialorder %v28, 0.0
  %vm53 = vcmp.gt.f32.partialorder %v29, 0.0
  %v54 = vsel %vm38, 1, 0
  %v55 = vsel %vm39, 1, 0
  %v56 = vsel %vm40, 1, 0
  %v57 = vsel %vm41, 1, 0
  %v58 = vsel %vm42, 1, 0
  %v59 = vsel %vm43, 1, 0
  %v60 = vsel %vm44, 1, 0
  %v61 = vsel %vm45, 1, 0
  %v62 = vsel %vm46, 1, 0
  %v63 = vsel %vm47, 1, 0
  %v64 = vsel %vm48, 1, 0
  %v65 = vsel %vm49, 1, 0
  %v66 = vsel %vm50, 1, 0
  %v67 = vsel %vm51, 1, 0
  %v68 = vsel %vm52, 1, 0
  %v69 = vsel %vm53, 1, 0
  %70 = vset.pattern.permute.xlu0 1
  %71 = vperm.xlu0 %70, %v54
  %v72 = vpop.permute.xlu0 %71
  %73 = vset.pattern.permute.xlu0 1
  %74 = vperm.xlu0 %73, %v55
  %v75 = vpop.permute.xlu0 %74
  %76 = vset.pattern.permute.xlu0 1
  %77 = vperm.xlu0 %76, %v56
  %v78 = vpop.permute.xlu0 %77
  %79 = vset.pattern.permute.xlu0 1
  %80 = vperm.xlu0 %79, %v57
  %v81 = vpop.permute.xlu0 %80
  %82 = vset.pattern.permute.xlu0 1
  %83 = vperm.xlu0 %82, %v58
  %v84 = vpop.permute.xlu0 %83
  %85 = vset.pattern.permute.xlu0 1
  %86 = vperm.xlu0 %85, %v59
  %v87 = vpop.permute.xlu0 %86
  %88 = vset.pattern.permute.xlu0 1
  %89 = vperm.xlu0 %88, %v60
  %v90 = vpop.permute.xlu0 %89
  %91 = vset.pattern.permute.xlu0 1
  %92 = vperm.xlu0 %91, %v61
  %v93 = vpop.permute.xlu0 %92
  %94 = vset.pattern.permute.xlu0 1
  %95 = vperm.xlu0 %94, %v62
  %v96 = vpop.permute.xlu0 %95
  %97 = vset.pattern.permute.xlu0 1
  %98 = vperm.xlu0 %97, %v63
  %v99 = vpop.permute.xlu0 %98
  %100 = vset.pattern.permute.xlu0 1
  %101 = vperm.xlu0 %100, %v64
  %v102 = vpop.permute.xlu0 %101
  %103 = vset.pattern.permute.xlu0 1
  %104 = vperm.xlu0 %103, %v65
  %v105 = vpop.permute.xlu0 %104
  %106 = vset.pattern.permute.xlu0 1
  %107 = vperm.xlu0 %106, %v66
  %v108 = vpop.permute.xlu0 %107
  %109 = vset.pattern.permute.xlu0 1
  %110 = vperm.xlu0 %109, %v67
  %v111 = vpop.permute.xlu0 %110
  %112 = vset.pattern.permute.xlu0 1
  %113 = vperm.xlu0 %112, %v68
  %v114 = vpop.permute.xlu0 %113
  %115 = vset.pattern.permute.xlu0 1
  %116 = vperm.xlu0 %115, %v69
  %v117 = vpop.permute.xlu0 %116
  %vm118 = vcmp.eq.s32.totalorder %v72, 1
  %vm119 = vcmp.eq.s32.totalorder %v75, 1
  %vm120 = vcmp.eq.s32.totalorder %v78, 1
  %vm121 = vcmp.eq.s32.totalorder %v81, 1
  %vm122 = vcmp.eq.s32.totalorder %v84, 1
  %vm123 = vcmp.eq.s32.totalorder %v87, 1
  %vm124 = vcmp.eq.s32.totalorder %v90, 1
  %vm125 = vcmp.eq.s32.totalorder %v93, 1
  %vm126 = vcmp.eq.s32.totalorder %v96, 1
  %vm127 = vcmp.eq.s32.totalorder %v99, 1
  %vm128 = vcmp.eq.s32.totalorder %v102, 1
  %vm129 = vcmp.eq.s32.totalorder %v105, 1
  %vm130 = vcmp.eq.s32.totalorder %v108, 1
  %vm131 = vcmp.eq.s32.totalorder %v111, 1
  %vm132 = vcmp.eq.s32.totalorder %v114, 1
  %vm133 = vcmp.eq.s32.totalorder %v117, 1
  %v134 = vlaneseq
  %v135 = vshrl.u32 %v134, 7
  %v136 = vsub.s32 0, %v135
  %v137 = vrot.slane %v31, %v136
  %v138 = vlaneseq
  %v139 = vshrl.u32 %v138, 7
  %v140 = vsub.s32 0, %v139
  %v141 = vrot.slane %v32, %v140
  %v142 = vsel %vm118, %v137, %v141
  %v143 = vsel %vm119, %v137, %v141
  %v144 = vsel %vm120, %v137, %v141
  %v145 = vsel %vm121, %v137, %v141
  %v146 = vsel %vm122, %v137, %v141
  %v147 = vsel %vm123, %v137, %v141
  %v148 = vsel %vm124, %v137, %v141
  %v149 = vsel %vm125, %v137, %v141
  %v150 = vsel %vm126, %v137, %v141
  %v151 = vsel %vm127, %v137, %v141
  %v152 = vsel %vm128, %v137, %v141
  %v153 = vsel %vm129, %v137, %v141
  %v154 = vsel %vm130, %v137, %v141
  %v155 = vsel %vm131, %v137, %v141
  %v156 = vsel %vm132, %v137, %v141
  %v157 = vsel %vm133, %v137, %v141
  %v158 = vlaneseq
  %v159 = vshrl.u32 %v158, 7
  %v160 = vsub.s32 0, %v159
  %v161 = vrot.slane %v33, %v160
  %v162 = vlaneseq
  %v163 = vshrl.u32 %v162, 7
  %v164 = vsub.s32 0, %v163
  %v165 = vrot.slane %v34, %v164
  %v166 = vsel %vm118, %v161, %v165
  %v167 = vsel %vm119, %v161, %v165
  %v168 = vsel %vm120, %v161, %v165
  %v169 = vsel %vm121, %v161, %v165
  %v170 = vsel %vm122, %v161, %v165
  %v171 = vsel %vm123, %v161, %v165
  %v172 = vsel %vm124, %v161, %v165
  %v173 = vsel %vm125, %v161, %v165
  %v174 = vsel %vm126, %v161, %v165
  %v175 = vsel %vm127, %v161, %v165
  %v176 = vsel %vm128, %v161, %v165
  %v177 = vsel %vm129, %v161, %v165
  %v178 = vsel %vm130, %v161, %v165
  %v179 = vsel %vm131, %v161, %v165
  %v180 = vsel %vm132, %v161, %v165
  %v181 = vsel %vm133, %v161, %v165
  %183 = vset.pattern.permute.xlu0 0
  %184 = vperm.xlu0 %183, %v14
  %v185 = vpop.permute.xlu0 %184
  %188 = vset.pattern.permute.xlu0 0
  %189 = vperm.xlu0 %188, %v15
  %v190 = vpop.permute.xlu0 %189
  %193 = vset.pattern.permute.xlu0 0
  %194 = vperm.xlu0 %193, %v16
  %v195 = vpop.permute.xlu0 %194
  %198 = vset.pattern.permute.xlu0 0
  %199 = vperm.xlu0 %198, %v17
  %v200 = vpop.permute.xlu0 %199
  %203 = vset.pattern.permute.xlu0 0
  %204 = vperm.xlu0 %203, %v18
  %v205 = vpop.permute.xlu0 %204
  %208 = vset.pattern.permute.xlu0 0
  %209 = vperm.xlu0 %208, %v19
  %v210 = vpop.permute.xlu0 %209
  %213 = vset.pattern.permute.xlu0 0
  %214 = vperm.xlu0 %213, %v20
  %v215 = vpop.permute.xlu0 %214
  %218 = vset.pattern.permute.xlu0 0
  %219 = vperm.xlu0 %218, %v21
  %v220 = vpop.permute.xlu0 %219
  %223 = vset.pattern.permute.xlu0 0
  %224 = vperm.xlu0 %223, %v22
  %v225 = vpop.permute.xlu0 %224
  %228 = vset.pattern.permute.xlu0 0
  %229 = vperm.xlu0 %228, %v23
  %v230 = vpop.permute.xlu0 %229
  %233 = vset.pattern.permute.xlu0 0
  %234 = vperm.xlu0 %233, %v24
  %v235 = vpop.permute.xlu0 %234
  %238 = vset.pattern.permute.xlu0 0
  %239 = vperm.xlu0 %238, %v25
  %v240 = vpop.permute.xlu0 %239
  %243 = vset.pattern.permute.xlu0 0
  %244 = vperm.xlu0 %243, %v26
  %v245 = vpop.permute.xlu0 %244
  %248 = vset.pattern.permute.xlu0 0
  %249 = vperm.xlu0 %248, %v27
  %v250 = vpop.permute.xlu0 %249
  %253 = vset.pattern.permute.xlu0 0
  %254 = vperm.xlu0 %253, %v28
  %v255 = vpop.permute.xlu0 %254
  %258 = vset.pattern.permute.xlu0 0
  %259 = vperm.xlu0 %258, %v29
  %v260 = vpop.permute.xlu0 %259
  %v262 = vmul.f32 %v185, %v142
  %v263 = vmul.f32 %v190, %v143
  %v264 = vmul.f32 %v195, %v144
  %v265 = vmul.f32 %v200, %v145
  %v266 = vmul.f32 %v205, %v146
  %v267 = vmul.f32 %v210, %v147
  %v268 = vmul.f32 %v215, %v148
  %v269 = vmul.f32 %v220, %v149
  %v270 = vmul.f32 %v225, %v150
  %v271 = vmul.f32 %v230, %v151
  %v272 = vmul.f32 %v235, %v152
  %v273 = vmul.f32 %v240, %v153
  %v274 = vmul.f32 %v245, %v154
  %v275 = vmul.f32 %v250, %v155
  %v276 = vmul.f32 %v255, %v156
  %v277 = vmul.f32 %v260, %v157
  %v278 = vadd.f32 %v262, %v166
  %v279 = vadd.f32 %v263, %v167
  %v280 = vadd.f32 %v264, %v168
  %v281 = vadd.f32 %v265, %v169
  %v282 = vadd.f32 %v266, %v170
  %v283 = vadd.f32 %v267, %v171
  %v284 = vadd.f32 %v268, %v172
  %v285 = vadd.f32 %v269, %v173
  %v286 = vadd.f32 %v270, %v174
  %v287 = vadd.f32 %v271, %v175
  %v288 = vadd.f32 %v272, %v176
  %v289 = vadd.f32 %v273, %v177
  %v290 = vadd.f32 %v274, %v178
  %v291 = vadd.f32 %v275, %v179
  %v292 = vadd.f32 %v276, %v180
  %v293 = vadd.f32 %v277, %v181
  %v294 = vlaneseq
  %v295 = vshrl.u32 %v294, 7
  %v296 = vsub.s32 0, %v295
  %v297 = vrot.slane %v35, %v296
  %298 = vmatprep.subr.mxu0 0.0
  %299 = vmatpush1.msra.mxu0 %v293
  %300 = vmatprep.subr.mxu0 0.0
  %301 = vmatpush1.msra.mxu0 %v292
  %302 = vmatprep.subr.mxu0 0.0
  %303 = vmatpush1.msra.mxu0 %v291
  %304 = vmatprep.subr.mxu0 0.0
  %305 = vmatpush1.msra.mxu0 %v290
  %306 = vmatprep.subr.mxu0 0.0
  %307 = vmatpush1.msra.mxu0 %v289
  %308 = vmatprep.subr.mxu0 0.0
  %309 = vmatpush1.msra.mxu0 %v288
  %310 = vmatprep.subr.mxu0 0.0
  %311 = vmatpush1.msra.mxu0 %v287
  %312 = vmatprep.subr.mxu0 0.0
  %313 = vmatpush1.msra.mxu0 %v286
  %314 = vmatprep.subr.mxu0 0.0
  %315 = vmatpush1.msra.mxu0 %v285
  %316 = vmatprep.subr.mxu0 0.0
  %317 = vmatpush1.msra.mxu0 %v284
  %318 = vmatprep.subr.mxu0 0.0
  %319 = vmatpush1.msra.mxu0 %v283
  %320 = vmatprep.subr.mxu0 0.0
  %321 = vmatpush1.msra.mxu0 %v282
  %322 = vmatprep.subr.mxu0 0.0
  %323 = vmatpush1.msra.mxu0 %v281
  %324 = vmatprep.subr.mxu0 0.0
  %325 = vmatpush1.msra.mxu0 %v280
  %326 = vmatprep.subr.mxu0 0.0
  %327 = vmatpush1.msra.mxu0 %v279
  %328 = vmatprep.subr.mxu0 0.0
  %329 = vmatpush1.msra.mxu0 %v278
  %330 = vmatprep.subr.mxu0 0.0
  %331 = vmatpush2.msra.mxu0 0.0
  %332 = vmatprep.subr.mxu0 0.0
  %333 = vmatpush2.msra.mxu0 0.0
  %334 = vmatprep.subr.mxu0 0.0
  %335 = vmatpush2.msra.mxu0 0.0
  %336 = vmatprep.subr.mxu0 0.0
  %337 = vmatpush2.msra.mxu0 0.0
  %338 = vmatprep.subr.mxu0 0.0
  %339 = vmatpush2.msra.mxu0 0.0
  %340 = vmatprep.subr.mxu0 0.0
  %341 = vmatpush2.msra.mxu0 0.0
  %342 = vmatprep.subr.mxu0 0.0
  %343 = vmatpush2.msra.mxu0 0.0
  %344 = vmatprep.subr.mxu0 0.0
  %345 = vmatpush2.msra.mxu0 0.0
  %346 = vmatprep.subr.mxu0 0.0
  %347 = vmatpush2.msra.mxu0 0.0
  %348 = vmatprep.subr.mxu0 0.0
  %349 = vmatpush2.msra.mxu0 0.0
  %350 = vmatprep.subr.mxu0 0.0
  %351 = vmatpush2.msra.mxu0 0.0
  %352 = vmatprep.subr.mxu0 0.0
  %353 = vmatpush2.msra.mxu0 0.0
  %354 = vmatprep.subr.mxu0 0.0
  %355 = vmatpush2.msra.mxu0 0.0
  %356 = vmatprep.subr.mxu0 0.0
  %357 = vmatpush2.msra.mxu0 0.0
  %358 = vmatprep.subr.mxu0 0.0
  %359 = vmatpush2.msra.mxu0 0.0
  %360 = vmatprep.subr.mxu0 0.0
  %361 = vmatpush2.msra.mxu0 0.0
  %362 = vmatprep.mubr.f32.mxu0 0.0
  %363 = vmatmul.mubr.f32.gmra.mxu0 %v30
  %v364 = vpop.f32.mrf.mxu0
  %v365 = vadd.f32 %v297, %v364
  %v366 = vpop.f32.mrf.mxu0
  %367 = vdwg.mxu0
  %v368 = vmax.f32 %v365, 0.0
  %v369 = vlaneseq
  %v370 = vshrl.u32 %v369, 7
  %v371 = vsub.s32 0, %v370
  %v372 = vrot.slane %v36, %v371
  %v373 = vmul.f32 %v368, %v372
  %vm374 = vcmask 261120
  %v375 = vsel %vm374, %v373, 0.0
  %376 = vadd.xlane.f32.xlu0 %v375
  %v377 = vpop.xlane.xlu0 %376
  %v378 = vlaneseq
  %v379 = vshrl.u32 %v378, 7
  %v380 = vsub.s32 0, %v379
  %v381 = vrot.slane %v37, %v380
  %v382 = vadd.f32 %v377, %v381
  %vm383 = vcmask 7168
  %384 = vst.msk [vmem:[%s3] sm:$0xff] %vm383, %v382
  // Predicated region
  $region14: #{tpu_custom_call.1} parent=0 // pred_check
    _
  $region15: #{tpu_custom_call.1} parent=0 // pred_check_branch
    %386 = sbr.rel (0) target = $region17
  $region16: #{tpu_custom_call.1} parent=0 // pred_region
    _
  $region17: #{tpu_custom_call.1} parent=0 // pred_fallthru
    _
  // Predicated region
  $region18: #{tpu_custom_call.1} parent=0 // pred_check
    _
  $region19: #{tpu_custom_call.1} parent=0 // pred_check_branch
    %388 = sbr.rel (0) target = $region21
  $region20: #{tpu_custom_call.1} parent=0 // pred_region
    _
  $region21: #{tpu_custom_call.1} parent=0 // pred_fallthru
    _

</llo_original>
